<compile_context>
chip_gen: v5e
topology: v5e:2x2
jax: 0.10.0
libtpu: 0.0.40
codegen_flags: <defaults>
</compile_context>

<pallas_src>
import functools

import jax
import jax.numpy as jnp
from jax.experimental import pallas as pl
from jax.experimental.pallas import tpu as pltpu

_LANES = 128
_SUBLANES = 8
_MAX_ROWS_PER_BLOCK_F32 = 8192          # (8192, 128) f32 block = 4 MiB / input / buffer
_VMEM_LIMIT_BYTES = 32 * 1024 * 1024    # covers 2 inputs x {2,3} bufs x 4 MiB everywhere


def _round_up(x, k):
    return ((x + k - 1) // k) * k


def _is_v7x():
    """True only for v7x-class parts (2 TensorCores / chip)."""
    try:
        kind = jax.devices()[0].device_kind.lower()
    except Exception:  # non-TPU / exotic runtimes: be conservative
        return False
    return ("v7" in kind) or ("7x" in kind)


def _l2_loss_kernel(pred_ref, tgt_ref, out_ref, acc_ref, *,
                    m_rows, rows_per_block, blocks_per_core, needs_mask):
    """Accumulate sum((tgt - pred)^2) per core; emit per-lane partials at the end."""
    i = pl.program_id(1)  # sequential ("arbitrary") accumulation axis

    @pl.when(i == 0)
    def _():
        acc_ref[...] = jnp.zeros_like(acc_ref)

    diff = tgt_ref[...].astype(jnp.float32) - pred_ref[...].astype(jnp.float32)
    sq = diff * diff

    def accumulate(x):
        # vreg-shaped accumulation: fold (rows, 128) onto the (8, 128)
        # accumulator with plain vector adds.  The reshape is tile-boundary
        # aligned (rows % 8 == 0), so it lowers to strided vreg adds; if a
        # VMEM copy ever shows up in the bundle dump, replace with an unrolled
        # lax.fori_loop over (8, 128) row groups.
        acc_ref[...] += x.reshape(-1, _SUBLANES, _LANES).sum(axis=0)

    if needs_mask:
        # Only the partial tail block (or a fully-dummy block on the core that
        # drew the odd step -- its index was clamped in the index_map) needs
        # masking; gate it so fully-covered blocks keep the cheap path.
        c = pl.program_id(0)
        g = c * blocks_per_core + i               # unclamped global block index
        valid = m_rows - g * rows_per_block       # # of real rows in this block

        @pl.when(valid >= rows_per_block)
        def _():
            accumulate(sq)

        @pl.when(valid < rows_per_block)
        def _():
            row_ids = jax.lax.broadcasted_iota(jnp.int32, sq.shape, 0)
            accumulate(jnp.where(row_ids < valid, sq, 0.0))
    else:
        accumulate(sq)

    @pl.when(i == pl.num_programs(1) - 1)
    def _():
        # One sublane reduce per core; lane reduce + sqrt happen in the wrapper.
        out_ref[...] = jnp.sum(acc_ref[...], axis=0, keepdims=True)


@jax.jit
def l2_loss(h_pred, h_target):
    assert h_pred.shape == h_target.shape, "shapes must match (torch.norm path)"

    pred_flat = jnp.ravel(h_pred)
    tgt_flat = jnp.ravel(h_target)
    n = pred_flat.shape[0]

    # Pad only when the flat length is not a multiple of the 128-lane width
    # (needed for the zero-copy reshape to (M, 128)).  Sublane misalignment is
    # handled with the in-kernel row mask instead of padding.
    # TODO(synk): the <128-element lane tail could also be masked in-kernel to
    # avoid this copy for fully misaligned sizes.
    pad = (-n) % _LANES
    if pad:
        pred_flat = jnp.pad(pred_flat, (0, pad))   # zero pad -> diff == 0
        tgt_flat = jnp.pad(tgt_flat, (0, pad))
    m = (n + pad) // _LANES

    pred2d = pred_flat.reshape(m, _LANES)
    tgt2d = tgt_flat.reshape(m, _LANES)

    # Keep per-step DMA bytes constant across dtypes and keep the sublane dim
    # aligned to the packed tile factor (8 f32 / 16 bf16|f16 / 32 int8).
    itemsize = jnp.dtype(h_pred.dtype).itemsize
    rows_scale = max(1, 4 // itemsize)
    sub_mult = _SUBLANES * rows_scale
    max_rows = _MAX_ROWS_PER_BLOCK_F32 * rows_scale
    rows_per_block = min(max_rows, _round_up(m, sub_mult))

    total_blocks = pl.cdiv(m, rows_per_block)
    # Split the sequential reduction across the two TensorCores only on v7x and
    # only when there is more than one block; on single-TC v5e/v6e (or tiny
    # inputs) the split would just add dummy DMA traffic and mask overhead.
    is_v7x = _is_v7x()
    num_core_splits = 2 if (is_v7x and total_blocks >= 2) else 1
    blocks_per_core = pl.cdiv(total_blocks, num_core_splits)
    needs_mask = (m % rows_per_block != 0) or (
        total_blocks != num_core_splits * blocks_per_core)
    last_block = total_blocks - 1

    def in_map(c, i):
        # Clamp so a core that drew an "odd" dummy step re-reads a valid block
        # (its contribution is masked to zero inside the kernel).
        return (jnp.minimum(c * blocks_per_core + i, last_block), 0)

    kernel = functools.partial(
        _l2_loss_kernel,
        m_rows=m,
        rows_per_block=rows_per_block,
        blocks_per_core=blocks_per_core,
        needs_mask=needs_mask,
    )

    # Triple-buffer inputs only on v7x, where per-step DMA time is shortest and
    # issue-latency bubbles are proportionally largest.
    if is_v7x:
        in_spec = pl.BlockSpec((rows_per_block, _LANES), in_map,
                               pipeline_mode=pl.Buffered(3))
    else:
        in_spec = pl.BlockSpec((rows_per_block, _LANES), in_map)

    cost = pl.CostEstimate(
        flops=3 * n,                     # sub, mul, add per element
        transcendentals=0,               # sqrt done in the wrapper
        bytes_accessed=2 * n * itemsize + num_core_splits * _LANES * 4,
    )

    partial_sums = pl.pallas_call(
        kernel,
        out_shape=jax.ShapeDtypeStruct((1, num_core_splits * _LANES), jnp.float32),
        grid_spec=pltpu.PrefetchScalarGridSpec(
            num_scalar_prefetch=0,
            grid=(num_core_splits, blocks_per_core),
            in_specs=[in_spec, in_spec],
            out_specs=pl.BlockSpec((1, _LANES), lambda c, i: (0, c)),
            scratch_shapes=[pltpu.VMEM((_SUBLANES, _LANES), jnp.float32)],
        ),
        compiler_params=pltpu.CompilerParams(
            dimension_semantics=("parallel", "arbitrary"),
            vmem_limit_bytes=_VMEM_LIMIT_BYTES,
        ),
        cost_estimate=cost,
    )(pred2d, tgt2d)

    # Final cross-lane reduce + sqrt on the tiny (1, num_splits*128) slab.
    return jnp.sqrt(jnp.sum(partial_sums)).astype(h_pred.dtype)


if __name__ == "__main__":
    key = jax.random.PRNGKey(0)
    k1, k2 = jax.random.split(key)

    # Primary check: small NCHW feature tensors (aligned, single-block path).
    shape = (2, 4, 16, 16)
    h_pred = jax.random.normal(k1, shape, dtype=jnp.float32)
    h_target = jax.random.normal(k2, shape, dtype=jnp.float32)
    loss = l2_loss(h_pred, h_target)
    jax.block_until_ready(loss)
    ref = jnp.sqrt(jnp.sum((h_target - h_pred) ** 2))
    assert jnp.allclose(loss, ref, rtol=1e-5, atol=1e-5), (loss, ref)

    # Misaligned size -> exercises the (rare) 128-lane pad path.
    k3, k4 = jax.random.split(k1)
    a = jax.random.normal(k3, (5, 7, 13, 11), dtype=jnp.float32)
    b = jax.random.normal(k4, (5, 7, 13, 11), dtype=jnp.float32)
    got = l2_loss(a, b)
    jax.block_until_ready(got)
    want = jnp.sqrt(jnp.sum((b - a) ** 2))
    assert jnp.allclose(got, want, rtol=1e-4, atol=1e-4), (got, want)

    # Multi-block with a partial last block -> exercises the gated tail-row
    # masking (and the v7x two-way core split when run on v7x).
    k5, k6 = jax.random.split(k2)
    c = jax.random.normal(k5, (9, 1024, 128), dtype=jnp.float32)
    d = jax.random.normal(k6, (9, 1024, 128), dtype=jnp.float32)
    got2 = l2_loss(c, d)
    jax.block_until_ready(got2)
    want2 = jnp.sqrt(jnp.sum((d - c) ** 2))
    assert jnp.allclose(got2, want2, rtol=1e-4, atol=1e-4), (got2, want2)

    # bf16 inputs -> exercises the dtype-scaled block rows / packed-sublane path.
    pb = h_pred.astype(jnp.bfloat16)
    tb = h_target.astype(jnp.bfloat16)
    got3 = l2_loss(pb, tb)
    jax.block_until_ready(got3)
    want3 = jnp.sqrt(jnp.sum(
        (tb.astype(jnp.float32) - pb.astype(jnp.float32)) ** 2))
    assert jnp.allclose(got3.astype(jnp.float32), want3, rtol=2e-2, atol=2e-2), (
        got3, want3)

    print("KERNEL_OK")
</pallas_src>

<mosaic_0001>
module attributes {stable_mosaic.version = 11 : i64} {
  func.func @_l2_loss_kernel(%arg0: i32, %arg1: i32, %arg2: memref<16x128xf32, #tpu.memory_space<vmem>>, %arg3: memref<16x128xf32, #tpu.memory_space<vmem>>, %arg4: memref<1x128xf32, #tpu.memory_space<vmem>>, %arg5: memref<8x128xf32, #tpu.memory_space<vmem>>) attributes {dimension_semantics = [#tpu.dimension_semantics<parallel>, #tpu.dimension_semantics<arbitrary>], iteration_bounds = array<i64: 1, 1>, scalar_prefetch = 0 : i64, scratch_operands = 1 : i64, tpu.core_type = #tpu.core_type<tc>, window_params = [{transform_indices = @transform_0, window_bounds = array<i64: 16, 128>}, {transform_indices = @transform_1, window_bounds = array<i64: 16, 128>}, {transform_indices = @transform_2, window_bounds = array<i64: 1, 128>}]} {
    %c0_i32 = arith.constant 0 : i32
    %0 = arith.cmpi eq, %arg1, %c0_i32 : i32
    %1 = arith.extui %0 : i1 to i32
    %c0_i32_0 = arith.constant 0 : i32
    %2 = arith.cmpi ne, %1, %c0_i32_0 : i32
    scf.if %2 {
      %cst_10 = arith.constant 0.000000e+00 : f32
      %15 = vector.broadcast %cst_10 : f32 to vector<8x128xf32>
      %c0_11 = arith.constant 0 : index
      %c0_12 = arith.constant 0 : index
      %16 = vector.load %arg5[%c0_11, %c0_12] : memref<8x128xf32, #tpu.memory_space<vmem>>, vector<8x128xf32>
      tpu.vector_store %arg5[%c0_11, %c0_12], %15 {strides = array<i32>} : memref<8x128xf32, #tpu.memory_space<vmem>>, vector<8x128xf32>,
    } else {
    }
    %c0 = arith.constant 0 : index
    %c0_1 = arith.constant 0 : index
    %3 = vector.load %arg3[%c0, %c0_1] : memref<16x128xf32, #tpu.memory_space<vmem>>, vector<16x128xf32>
    %c0_2 = arith.constant 0 : index
    %c0_3 = arith.constant 0 : index
    %4 = vector.load %arg2[%c0_2, %c0_3] : memref<16x128xf32, #tpu.memory_space<vmem>>, vector<16x128xf32>
    %5 = arith.subf %3, %4 : vector<16x128xf32>
    %6 = arith.mulf %5, %5 : vector<16x128xf32>
    %c0_4 = arith.constant 0 : index
    %c0_5 = arith.constant 0 : index
    %7 = vector.load %arg5[%c0_4, %c0_5] : memref<8x128xf32, #tpu.memory_space<vmem>>, vector<8x128xf32>
    %8 = vector.shape_cast %6 : vector<16x128xf32> to vector<2x8x128xf32>
    %cst = arith.constant dense<0.000000e+00> : vector<8x128xf32>
    %9 = vector.multi_reduction <add>, %8, %cst [0] : vector<2x8x128xf32> to vector<8x128xf32>
    %10 = arith.addf %7, %9 : vector<8x128xf32>
    %c0_6 = arith.constant 0 : index
    %c0_7 = arith.constant 0 : index
    %11 = vector.load %arg5[%c0_6, %c0_7] : memref<8x128xf32, #tpu.memory_space<vmem>>, vector<8x128xf32>
    tpu.vector_store %arg5[%c0_6, %c0_7], %10 {strides = array<i32>} : memref<8x128xf32, #tpu.memory_space<vmem>>, vector<8x128xf32>,
    %c0_i32_8 = arith.constant 0 : i32
    %12 = arith.cmpi eq, %arg1, %c0_i32_8 : i32
    %13 = arith.extui %12 : i1 to i32
    %c0_i32_9 = arith.constant 0 : i32
    %14 = arith.cmpi ne, %13, %c0_i32_9 : i32
    scf.if %14 {
      %c0_10 = arith.constant 0 : index
      %c0_11 = arith.constant 0 : index
      %15 = vector.load %arg5[%c0_10, %c0_11] : memref<8x128xf32, #tpu.memory_space<vmem>>, vector<8x128xf32>
      %cst_12 = arith.constant dense<0.000000e+00> : vector<128xf32>
      %16 = vector.multi_reduction <add>, %15, %cst_12 [0] : vector<8x128xf32> to vector<128xf32>
      %17 = vector.shape_cast %16 : vector<128xf32> to vector<1x128xf32>
      %c0_13 = arith.constant 0 : index
      %c0_14 = arith.constant 0 : index
      %18 = vector.load %arg4[%c0_13, %c0_14] : memref<1x128xf32, #tpu.memory_space<vmem>>, vector<1x128xf32>
      tpu.vector_store %arg4[%c0_13, %c0_14], %17 {strides = array<i32>} : memref<1x128xf32, #tpu.memory_space<vmem>>, vector<1x128xf32>,
    } else {
    }
    return
  }
  func.func @transform_0(%arg0: i32, %arg1: i32) -> (i32, i32) {
    %c1_i32 = arith.constant 1 : i32
    %0 = arith.muli %arg0, %c1_i32 : i32
    %1 = arith.addi %0, %arg1 : i32
    %c0_i32 = arith.constant 0 : i32
    %2 = arith.minsi %1, %c0_i32 : i32
    %c0_i32_0 = arith.constant 0 : i32
    %c0_i32_1 = arith.constant 0 : i32
    return %2, %c0_i32_0 : i32, i32
  }
  func.func @transform_1(%arg0: i32, %arg1: i32) -> (i32, i32) {
    %c1_i32 = arith.constant 1 : i32
    %0 = arith.muli %arg0, %c1_i32 : i32
    %1 = arith.addi %0, %arg1 : i32
    %c0_i32 = arith.constant 0 : i32
    %2 = arith.minsi %1, %c0_i32 : i32
    %c0_i32_0 = arith.constant 0 : i32
    %c0_i32_1 = arith.constant 0 : i32
    return %2, %c0_i32_0 : i32, i32
  }
  func.func @transform_2(%arg0: i32, %arg1: i32) -> (i32, i32) {
    %c0_i32 = arith.constant 0 : i32
    %c0_i32_0 = arith.constant 0 : i32
    return %c0_i32, %arg0 : i32, i32
  }
}

</mosaic_0001>

<llo_original>
// kernel: l2_loss.1
$region0: #{l2_loss.1}
  #allocation0 [shape = 'u32[]', space=smem, size = 0x4, offset = 0x4, fixed_abs, tag = 'smem constant byte address 0x4 - core index']
  #allocation1 [shape = 'u32[72,128]{1,0:T(1,128)}', space=vmem, size = 0x9000, scoped, tag = 'internal scratch']
  #allocation2 [shape = 'f32[8,128]{1,0:T(8,128)}', space=vmem, size = 0x1000, scoped, tag = 'scratch operand']
  %s0 = inlined_call_operand.vmem [shape: f32[16,128], index: 0, kind: input, shape index: {}]
  %s1 = inlined_call_operand.vmem [shape: f32[16,128], index: 1, kind: input, shape index: {}]
  %s2 = inlined_call_operand.vmem [shape: f32[1,128], index: 2, kind: output, shape index: {}]
  %s3 = sld [smem:[#allocation0]]
  $region26: #{l2_loss.1} parent=0
    _
  %s5 = ssub.s32 1, %s3
  %s6 = scalar_select 0, %s5, %s3
  // Predicated region
  $region2: #{l2_loss.1} parent=0 // pred_check
    _
  $region3: #{l2_loss.1} parent=0 // pred_check_branch
    %8 = sbr.rel (0) target = $region5
  $region4: #{l2_loss.1} parent=0 // pred_region
    %s9 = sadd.s32 0, 0
    %p10 = scmp.lt.s32.totalorder %s9, 0
    %s11 = scalar_select %p10, %s9, 0
    %s12 = smul.u32 2, %s11
    %p13 = scmp.lt.s32.totalorder %s12, 1
    %s14 = scalar_select %p13, %s12, 1
    %s15 = smul.addr %s14, 8
    %s16 = scalar_lea.vmem %s0, %s15
    %s17 = sadd.s32 0, 0
    %p18 = scmp.lt.s32.totalorder %s17, 0
    %s19 = scalar_select %p18, %s17, 0
    %s20 = smul.u32 2, %s19
  $region5: #{l2_loss.1} parent=0 // pred_fallthru
    _
  // Predicated region
  $region6: #{l2_loss.1} parent=0 // pred_check
    _
  $region7: #{l2_loss.1} parent=0 // pred_check_branch
    %22 = sbr.rel (0) target = $region9
  $region8: #{l2_loss.1} parent=0 // pred_region
    %s23 = sadd.s32 0, 0
    %p24 = scmp.lt.s32.totalorder %s23, 0
    %s25 = scalar_select %p24, %s23, 0
    %s26 = smul.u32 2, %s25
    %p27 = scmp.lt.s32.totalorder %s26, 1
    %s28 = scalar_select %p27, %s26, 1
    %s29 = smul.addr %s28, 8
    %s30 = scalar_lea.vmem %s1, %s29
    %s31 = sadd.s32 0, 0
    %p32 = scmp.lt.s32.totalorder %s31, 0
    %s33 = scalar_select %p32, %s31, 0
    %s34 = smul.u32 2, %s33
  $region9: #{l2_loss.1} parent=0 // pred_fallthru
    _
  %s35 = sadd.s32 0, 0
  %p36 = scmp.lt.s32.totalorder %s35, 0
  %s37 = scalar_select %p36, %s35, 0
  %s38 = smul.u32 2, %s37
  %p39 = scmp.lt.s32.totalorder %s38, 1
  %s40 = scalar_select %p39, %s38, 1
  %s41 = smul.addr %s40, 8
  %s42 = scalar_lea.vmem %s0, %s41
  %s43 = sadd.s32 0, 0
  %p44 = scmp.lt.s32.totalorder %s43, 0
  %s45 = scalar_select %p44, %s43, 0
  %s46 = smul.u32 2, %s45
  %p47 = scmp.lt.s32.totalorder %s46, 1
  %s48 = scalar_select %p47, %s46, 1
  %s49 = smul.addr %s48, 8
  %s50 = scalar_lea.vmem %s1, %s49
  %s51 = sadd.s32 0, 0
  %p52 = scmp.lt.s32.totalorder %s51, 0
  %s53 = scalar_select %p52, %s51, 0
  %s54 = smul.u32 2, %s53
  %p55 = scmp.lt.s32.totalorder %s54, 1
  %s56 = scalar_select %p55, %s54, 1
  %s57 = smul.addr %s56, 8
  %s58 = scalar_lea.vmem %s0, %s57
  %s59 = sadd.s32 0, 0
  %p60 = scmp.lt.s32.totalorder %s59, 0
  %s61 = scalar_select %p60, %s59, 0
  %s62 = smul.u32 2, %s61
  %s63 = sadd.s32 0, 0
  %p64 = scmp.lt.s32.totalorder %s63, 0
  %s65 = scalar_select %p64, %s63, 0
  %s66 = smul.u32 2, %s65
  %p67 = scmp.lt.s32.totalorder %s66, 1
  %s68 = scalar_select %p67, %s66, 1
  %s69 = smul.addr %s68, 8
  %s70 = scalar_lea.vmem %s1, %s69
  %s71 = sadd.s32 0, 0
  %p72 = scmp.lt.s32.totalorder %s71, 0
  %s73 = scalar_select %p72, %s71, 0
  %s74 = smul.u32 2, %s73
  %p75 = scmp.eq.s32.totalorder 0, 0
  // Predicated region
  $region10: #{l2_loss.1} parent=0 // pred_check
    %p76 = pneg %p75
  $region11: #{l2_loss.1} parent=0 // pred_check_branch
    %78 = sbr.rel (%p76) target = $region13
  $region12: #{l2_loss.1} parent=0 // pred_region
    %79 = vst [vmem:[#allocation2] sm:$0xff] 0.0
  $region13: #{l2_loss.1} parent=0 // pred_fallthru
    _
  %v80 = vld [vmem:[%s70] sm:$0xff]
  %v81 = vld [vmem:[%s70 + $0x8] sm:$0xff]
  %v82 = vld [vmem:[%s58] sm:$0xff]
  %v83 = vld [vmem:[%s58 + $0x8] sm:$0xff]
  %v84 = vsub.f32 %v80, %v82
  %v85 = vsub.f32 %v81, %v83
  %v86 = vmul.f32 %v84, %v84
  %v87 = vmul.f32 %v85, %v85
  %v88 = vld [vmem:[#allocation2] sm:$0xff]
  %v89 = vadd.f32 %v86, %v87
  %v90 = vadd.f32 %v88, %v89
  %91 = vst [vmem:[#allocation2] sm:$0xff] %v90
  // Predicated region
  $region14: #{l2_loss.1} parent=0 // pred_check
    %p92 = pneg %p75
  $region15: #{l2_loss.1} parent=0 // pred_check_branch
    %94 = sbr.rel (%p92) target = $region17
  $region16: #{l2_loss.1} parent=0 // pred_region
    %v95 = vld [vmem:[#allocation2] sm:$0xff]
    %v96 = vrot.slane %v95, 4
    %v97 = vadd.f32 %v95, %v96
    %v98 = vrot.slane %v97, 2
    %v99 = vadd.f32 %v97, %v98
    %v100 = vrot.slane %v99, 1
    %v101 = vadd.f32 %v99, %v100
    %102 = vst [vmem:[%s2] sm:$0x1] %v101
  $region17: #{l2_loss.1} parent=0 // pred_fallthru
    _
  // Predicated region
  $region18: #{l2_loss.1} parent=0 // pred_check
    _
  $region19: #{l2_loss.1} parent=0 // pred_check_branch
    %104 = sbr.rel (0) target = $region21
  $region20: #{l2_loss.1} parent=0 // pred_region
    _
  $region21: #{l2_loss.1} parent=0 // pred_fallthru
    _
  // Predicated region
  $region22: #{l2_loss.1} parent=0 // pred_check
    _
  $region23: #{l2_loss.1} parent=0 // pred_check_branch
    %106 = sbr.rel (0) target = $region25
  $region24: #{l2_loss.1} parent=0 // pred_region
    _
  $region25: #{l2_loss.1} parent=0 // pred_fallthru
    _

</llo_original>
